<compile_context>
chip_gen: v6e
topology: v6e:2x2x1
jax: 0.10.0
libtpu: 0.0.40
codegen_flags: <defaults>
</compile_context>

<pallas_src>
import functools

import jax
import jax.numpy as jnp
from jax.experimental import pallas as pl
from jax.experimental.pallas import tpu as pltpu


def _kspace_block_kernel(x_ref, mask_ref, w1_ref, w2_ref, o_ref,
                         col1_ref, col2_ref, *, H: int, W: int, K: int,
                         eps: float):
    """Fused conv1+IN1 (+dropout=id) -> conv2+IN2 (+dropout=id) for one image.

    x_ref    : (1, Cin, H*W)     channel-major input slab (lane dim = H*W)
    mask_ref : (K*K, H*W)        precomputed 0/1 boundary masks, one row per tap
    w1_ref   : (Cout, K*K*Cin)   conv1 weight, columns ordered (kh, kw, cin)
    w2_ref   : (Cout, K*K*Cout)  conv2 weight, columns ordered (kh, kw, cin)
    o_ref    : (1, Cout, H*W)    lane-dense output slab
    col1_ref : (K*K*Cin, H*W)    VMEM scratch: channel-major im2col, layer 1
    col2_ref : (K*K*Cout, H*W)   VMEM scratch: channel-major im2col, layer 2
    """
    HW = H * W
    pad = (K - 1) // 2
    inv_hw = 1.0 / float(HW)

    def fill_col(act, col_ref, C):
        # act: (C, HW).  For tap (kh, kw):
        #   col[(kh*K + kw)*C + c, h*W + w] = act_padded[c, h + kh - pad, w + kw - pad]
        # realized as a lane rotation (XLU) of the full-width rows plus a 0/1
        # boundary mask -> only full-lane-width (unmasked-lane) stores.
        for kh in range(K):
            dh = kh - pad
            for kw in range(K):
                dw = kw - pad
                t = kh * K + kw
                delta = dh * W + dw
                if delta == 0:
                    tap = act                              # center tap: no shift/mask
                else:
                    shifted = pltpu.roll(act, (-delta) % HW, axis=1)
                    tap = shifted * mask_ref[t:t + 1, :]   # zero outside the image
                col_ref[t * C:(t + 1) * C, :] = tap

    def instance_norm(y):
        # y: (C, HW); per-channel stats over the lane axis, two-pass variance.
        mean = jnp.sum(y, axis=1, keepdims=True) * inv_hw
        centered = y - mean
        var = jnp.sum(centered * centered, axis=1, keepdims=True) * inv_hw
        return centered * jax.lax.rsqrt(var + eps)

    # ---- layer 1: conv -> InstanceNorm (-> Dropout2d = identity in eval) ----
    fill_col(x_ref[0], col1_ref, x_ref.shape[1])
    y1 = jnp.dot(w1_ref[...], col1_ref[...],
                 preferred_element_type=jnp.float32)       # (Cout, HW)
    y1 = instance_norm(y1)

    # ---- layer 2: conv -> InstanceNorm (-> Dropout2d = identity in eval) ----
    fill_col(y1, col2_ref, y1.shape[0])
    y2 = jnp.dot(w2_ref[...], col2_ref[...],
                 preferred_element_type=jnp.float32)       # (Cout, HW)
    o_ref[0] = instance_norm(y2).astype(o_ref.dtype)


def kspace_conv_block_forward(x_nchw: jax.Array,
                              w1_oikk: jax.Array,
                              w2_oikk: jax.Array,
                              drop_prob: float = 0.0,
                              eps: float = 1e-5) -> jax.Array:
    """Forward pass of kspace_ConvBlock. Input/output are NCHW like PyTorch."""
    N, Cin, H, W = x_nchw.shape
    Cout, Cin_w, K, K2 = w1_oikk.shape
    assert Cin_w == Cin and K == K2
    if K % 2 == 0:
        # pad=(K-1)//2 with even K changes the output size in PyTorch; only the
        # "same"-sized odd-K case is supported here.
        raise NotImplementedError("kspace_ConvBlock Pallas kernel supports odd kernel_size only")
    del drop_prob  # Dropout2d is identity in eval-mode forward (see TODO above).

    pad = (K - 1) // 2
    HW = H * W

    # Layout glue (tiny, done once):
    #   input  NCHW -> channel-major (N, Cin, H*W)        (free reshape)
    #   conv1  OIHW -> (Cout, K*K*Cin), cols ordered (kh, kw, cin)
    #   conv2  OIHW -> (Cout, K*K*Cout), cols ordered (kh, kw, cin)
    x_cm = x_nchw.reshape(N, Cin, HW)
    w1_mat = jnp.transpose(w1_oikk, (0, 2, 3, 1)).reshape(Cout, K * K * Cin)
    w2_mat = jnp.transpose(w2_oikk, (0, 2, 3, 1)).reshape(Cout, K * K * Cout)

    # Precomputed 0/1 boundary masks per tap, shape (K*K, HW).  Keeps all
    # integer div/mod out of the kernel; masks are shared by both conv layers.
    hh = jnp.arange(H, dtype=jnp.int32).reshape(H, 1)
    ww = jnp.arange(W, dtype=jnp.int32).reshape(1, W)
    mask_rows = []
    for kh in range(K):
        dh = kh - pad
        for kw in range(K):
            dw = kw - pad
            m = ((hh + dh >= 0) & (hh + dh < H) &
                 (ww + dw >= 0) & (ww + dw < W))
            mask_rows.append(m.reshape(HW))
    mask_arr = jnp.stack(mask_rows).astype(x_nchw.dtype)   # (K*K, HW)

    kernel = functools.partial(_kspace_block_kernel, H=H, W=W, K=K, eps=eps)
    out = pl.pallas_call(
        kernel,
        out_shape=jax.ShapeDtypeStruct((N, Cout, HW), x_nchw.dtype),
        grid=(N,),  # one image per grid step; images are independent
        in_specs=[
            pl.BlockSpec((1, Cin, HW), lambda n: (n, 0, 0)),
            pl.BlockSpec((K * K, HW), lambda n: (0, 0)),
            pl.BlockSpec((Cout, K * K * Cin), lambda n: (0, 0)),
            pl.BlockSpec((Cout, K * K * Cout), lambda n: (0, 0)),
        ],
        out_specs=pl.BlockSpec((1, Cout, HW), lambda n: (n, 0, 0)),
        scratch_shapes=[
            pltpu.VMEM((K * K * Cin, HW), jnp.float32),    # im2col, layer 1
            pltpu.VMEM((K * K * Cout, HW), jnp.float32),   # im2col, layer 2
        ],
        compiler_params=pltpu.CompilerParams(
            dimension_semantics=("parallel",),
        ),
    )(x_cm, mask_arr, w1_mat, w2_mat)

    # (N, Cout, H*W) -> (N, Cout, H, W): already NCHW, pure (free) reshape.
    return out.reshape(N, Cout, H, W)


def _reference_forward(x_nchw, w1_oikk, w2_oikk, eps=1e-5):
    """Pure-JAX reference (lax conv + instance norm) for correctness check."""
    def layer(x, w):
        p = (w.shape[-1] - 1) // 2
        y = jax.lax.conv_general_dilated(
            x, w, window_strides=(1, 1), padding=[(p, p), (p, p)],
            dimension_numbers=("NCHW", "OIHW", "NCHW"),
        )
        mean = jnp.mean(y, axis=(2, 3), keepdims=True)
        var = jnp.mean((y - mean) ** 2, axis=(2, 3), keepdims=True)
        return (y - mean) * jax.lax.rsqrt(var + eps)

    return layer(layer(x_nchw, w1_oikk), w2_oikk)


if __name__ == "__main__":
    key = jax.random.PRNGKey(0)
    k_x, k_w1, k_w2 = jax.random.split(key, 3)

    # Small shapes consistent with the module's forward: (N, in_chans, H, W)
    N, in_chans, out_chans, H, W, K = 2, 4, 8, 16, 16, 3
    drop_prob = 0.0

    x = jax.random.normal(k_x, (N, in_chans, H, W), dtype=jnp.float32)
    # Deterministic parameter init (kaiming-ish scale), PyTorch OIHW layout.
    fan_in1 = in_chans * K * K
    fan_in2 = out_chans * K * K
    w1 = jax.random.normal(k_w1, (out_chans, in_chans, K, K), jnp.float32) / jnp.sqrt(fan_in1)
    w2 = jax.random.normal(k_w2, (out_chans, out_chans, K, K), jnp.float32) / jnp.sqrt(fan_in2)

    out = jax.block_until_ready(kspace_conv_block_forward(x, w1, w2, drop_prob))

    ref = jax.block_until_ready(_reference_forward(x, w1, w2))
    assert out.shape == (N, out_chans, H, W), out.shape
    err = float(jnp.max(jnp.abs(out - ref)))
    assert jnp.allclose(out, ref, atol=1e-4, rtol=1e-4), f"max abs err = {err}"

    print("KERNEL_OK")
</pallas_src>

<mosaic_0001>
module attributes {stable_mosaic.version = 11 : i64} {
  func.func @_kspace_block_kernel(%arg0: i32, %arg1: memref<1x4x256xf32, #tpu.memory_space<vmem>>, %arg2: memref<9x256xf32, #tpu.memory_space<vmem>>, %arg3: memref<8x36xf32, #tpu.memory_space<vmem>>, %arg4: memref<8x72xf32, #tpu.memory_space<vmem>>, %arg5: memref<1x8x256xf32, #tpu.memory_space<vmem>>, %arg6: memref<36x256xf32, #tpu.memory_space<vmem>>, %arg7: memref<72x256xf32, #tpu.memory_space<vmem>>) attributes {dimension_semantics = [#tpu.dimension_semantics<parallel>], iteration_bounds = array<i64: 2>, scalar_prefetch = 0 : i64, scratch_operands = 2 : i64, tpu.core_type = #tpu.core_type<tc>, window_params = [{transform_indices = @transform_0, window_bounds = array<i64: 1, 4, 256>}, {pipeline_mode = #tpu.pipeline_mode<synchronous>, transform_indices = @transform_1, window_bounds = array<i64: 9, 256>}, {pipeline_mode = #tpu.pipeline_mode<synchronous>, transform_indices = @transform_2, window_bounds = array<i64: 8, 36>}, {pipeline_mode = #tpu.pipeline_mode<synchronous>, transform_indices = @transform_3, window_bounds = array<i64: 8, 72>}, {transform_indices = @transform_4, window_bounds = array<i64: 1, 8, 256>}]} {
    %c0 = arith.constant 0 : index
    %c0_0 = arith.constant 0 : index
    %c0_1 = arith.constant 0 : index
    %0 = vector.load %arg1[%c0, %c0_0, %c0_1] : memref<1x4x256xf32, #tpu.memory_space<vmem>>, vector<1x4x256xf32>
    %1 = vector.shape_cast %0 : vector<1x4x256xf32> to vector<4x256xf32>
    %c17_i32 = arith.constant 17 : i32
    %2 = tpu.dynamic_rotate %1 by %c17_i32 dim 1 : vector<4x256xf32>, i32 -> vector<4x256xf32>
    %c0_2 = arith.constant 0 : index
    %c0_3 = arith.constant 0 : index
    %3 = vector.load %arg2[%c0_2, %c0_3] : memref<9x256xf32, #tpu.memory_space<vmem>>, vector<1x256xf32>
    %4 = vector.broadcast %3 : vector<1x256xf32> to vector<4x256xf32>
    %5 = arith.mulf %2, %4 : vector<4x256xf32>
    %c0_4 = arith.constant 0 : index
    %c0_5 = arith.constant 0 : index
    %6 = vector.load %arg6[%c0_4, %c0_5] : memref<36x256xf32, #tpu.memory_space<vmem>>, vector<4x256xf32>
    tpu.vector_store %arg6[%c0_4, %c0_5], %5 {strides = array<i32>} : memref<36x256xf32, #tpu.memory_space<vmem>>, vector<4x256xf32>,
    %c16_i32 = arith.constant 16 : i32
    %7 = tpu.dynamic_rotate %1 by %c16_i32 dim 1 : vector<4x256xf32>, i32 -> vector<4x256xf32>
    %c1 = arith.constant 1 : index
    %c0_6 = arith.constant 0 : index
    %8 = vector.load %arg2[%c1, %c0_6] : memref<9x256xf32, #tpu.memory_space<vmem>>, vector<1x256xf32>
    %9 = vector.broadcast %8 : vector<1x256xf32> to vector<4x256xf32>
    %10 = arith.mulf %7, %9 : vector<4x256xf32>
    %c4 = arith.constant 4 : index
    %c0_7 = arith.constant 0 : index
    %11 = vector.load %arg6[%c4, %c0_7] : memref<36x256xf32, #tpu.memory_space<vmem>>, vector<4x256xf32>
    tpu.vector_store %arg6[%c4, %c0_7], %10 {strides = array<i32>} : memref<36x256xf32, #tpu.memory_space<vmem>>, vector<4x256xf32>,
    %c15_i32 = arith.constant 15 : i32
    %12 = tpu.dynamic_rotate %1 by %c15_i32 dim 1 : vector<4x256xf32>, i32 -> vector<4x256xf32>
    %c2 = arith.constant 2 : index
    %c0_8 = arith.constant 0 : index
    %13 = vector.load %arg2[%c2, %c0_8] : memref<9x256xf32, #tpu.memory_space<vmem>>, vector<1x256xf32>
    %14 = vector.broadcast %13 : vector<1x256xf32> to vector<4x256xf32>
    %15 = arith.mulf %12, %14 : vector<4x256xf32>
    %c8 = arith.constant 8 : index
    %c0_9 = arith.constant 0 : index
    %16 = vector.load %arg6[%c8, %c0_9] : memref<36x256xf32, #tpu.memory_space<vmem>>, vector<4x256xf32>
    tpu.vector_store %arg6[%c8, %c0_9], %15 {strides = array<i32>} : memref<36x256xf32, #tpu.memory_space<vmem>>, vector<4x256xf32>,
    %c1_i32 = arith.constant 1 : i32
    %17 = tpu.dynamic_rotate %1 by %c1_i32 dim 1 : vector<4x256xf32>, i32 -> vector<4x256xf32>
    %c3 = arith.constant 3 : index
    %c0_10 = arith.constant 0 : index
    %18 = vector.load %arg2[%c3, %c0_10] : memref<9x256xf32, #tpu.memory_space<vmem>>, vector<1x256xf32>
    %19 = vector.broadcast %18 : vector<1x256xf32> to vector<4x256xf32>
    %20 = arith.mulf %17, %19 : vector<4x256xf32>
    %c12 = arith.constant 12 : index
    %c0_11 = arith.constant 0 : index
    %21 = vector.load %arg6[%c12, %c0_11] : memref<36x256xf32, #tpu.memory_space<vmem>>, vector<4x256xf32>
    tpu.vector_store %arg6[%c12, %c0_11], %20 {strides = array<i32>} : memref<36x256xf32, #tpu.memory_space<vmem>>, vector<4x256xf32>,
    %c16 = arith.constant 16 : index
    %c0_12 = arith.constant 0 : index
    %22 = vector.load %arg6[%c16, %c0_12] : memref<36x256xf32, #tpu.memory_space<vmem>>, vector<4x256xf32>
    tpu.vector_store %arg6[%c16, %c0_12], %1 {strides = array<i32>} : memref<36x256xf32, #tpu.memory_space<vmem>>, vector<4x256xf32>,
    %c255_i32 = arith.constant 255 : i32
    %23 = tpu.dynamic_rotate %1 by %c255_i32 dim 1 : vector<4x256xf32>, i32 -> vector<4x256xf32>
    %c5 = arith.constant 5 : index
    %c0_13 = arith.constant 0 : index
    %24 = vector.load %arg2[%c5, %c0_13] : memref<9x256xf32, #tpu.memory_space<vmem>>, vector<1x256xf32>
    %25 = vector.broadcast %24 : vector<1x256xf32> to vector<4x256xf32>
    %26 = arith.mulf %23, %25 : vector<4x256xf32>
    %c20 = arith.constant 20 : index
    %c0_14 = arith.constant 0 : index
    %27 = vector.load %arg6[%c20, %c0_14] : memref<36x256xf32, #tpu.memory_space<vmem>>, vector<4x256xf32>
    tpu.vector_store %arg6[%c20, %c0_14], %26 {strides = array<i32>} : memref<36x256xf32, #tpu.memory_space<vmem>>, vector<4x256xf32>,
    %c241_i32 = arith.constant 241 : i32
    %28 = tpu.dynamic_rotate %1 by %c241_i32 dim 1 : vector<4x256xf32>, i32 -> vector<4x256xf32>
    %c6 = arith.constant 6 : index
    %c0_15 = arith.constant 0 : index
    %29 = vector.load %arg2[%c6, %c0_15] : memref<9x256xf32, #tpu.memory_space<vmem>>, vector<1x256xf32>
    %30 = vector.broadcast %29 : vector<1x256xf32> to vector<4x256xf32>
    %31 = arith.mulf %28, %30 : vector<4x256xf32>
    %c24 = arith.constant 24 : index
    %c0_16 = arith.constant 0 : index
    %32 = vector.load %arg6[%c24, %c0_16] : memref<36x256xf32, #tpu.memory_space<vmem>>, vector<4x256xf32>
    tpu.vector_store %arg6[%c24, %c0_16], %31 {strides = array<i32>} : memref<36x256xf32, #tpu.memory_space<vmem>>, vector<4x256xf32>,
    %c240_i32 = arith.constant 240 : i32
    %33 = tpu.dynamic_rotate %1 by %c240_i32 dim 1 : vector<4x256xf32>, i32 -> vector<4x256xf32>
    %c7 = arith.constant 7 : index
    %c0_17 = arith.constant 0 : index
    %34 = vector.load %arg2[%c7, %c0_17] : memref<9x256xf32, #tpu.memory_space<vmem>>, vector<1x256xf32>
    %35 = vector.broadcast %34 : vector<1x256xf32> to vector<4x256xf32>
    %36 = arith.mulf %33, %35 : vector<4x256xf32>
    %c28 = arith.constant 28 : index
    %c0_18 = arith.constant 0 : index
    %37 = vector.load %arg6[%c28, %c0_18] : memref<36x256xf32, #tpu.memory_space<vmem>>, vector<4x256xf32>
    tpu.vector_store %arg6[%c28, %c0_18], %36 {strides = array<i32>} : memref<36x256xf32, #tpu.memory_space<vmem>>, vector<4x256xf32>,
    %c239_i32 = arith.constant 239 : i32
    %38 = tpu.dynamic_rotate %1 by %c239_i32 dim 1 : vector<4x256xf32>, i32 -> vector<4x256xf32>
    %c8_19 = arith.constant 8 : index
    %c0_20 = arith.constant 0 : index
    %39 = vector.load %arg2[%c8_19, %c0_20] : memref<9x256xf32, #tpu.memory_space<vmem>>, vector<1x256xf32>
    %40 = vector.broadcast %39 : vector<1x256xf32> to vector<4x256xf32>
    %41 = arith.mulf %38, %40 : vector<4x256xf32>
    %c32 = arith.constant 32 : index
    %c0_21 = arith.constant 0 : index
    %42 = vector.load %arg6[%c32, %c0_21] : memref<36x256xf32, #tpu.memory_space<vmem>>, vector<4x256xf32>
    tpu.vector_store %arg6[%c32, %c0_21], %41 {strides = array<i32>} : memref<36x256xf32, #tpu.memory_space<vmem>>, vector<4x256xf32>,
    %c0_22 = arith.constant 0 : index
    %c0_23 = arith.constant 0 : index
    %43 = vector.load %arg3[%c0_22, %c0_23] : memref<8x36xf32, #tpu.memory_space<vmem>>, vector<8x36xf32>
    %c0_24 = arith.constant 0 : index
    %c0_25 = arith.constant 0 : index
    %44 = vector.load %arg6[%c0_24, %c0_25] : memref<36x256xf32, #tpu.memory_space<vmem>>, vector<36x256xf32>
    %cst = arith.constant dense<0.000000e+00> : vector<8x256xf32>
    %45 = tpu.matmul %43, %44, %cst {dimension_numbers = #tpu.dot_dimension_numbers<[1], [0], [0], [1], [0, 0, 1, 1], [], []>} : vector<8x36xf32>, vector<36x256xf32>, vector<8x256xf32> -> vector<8x256xf32>
    %cst_26 = arith.constant dense<0.000000e+00> : vector<8xf32>
    %46 = vector.multi_reduction <add>, %45, %cst_26 [1] : vector<8x256xf32> to vector<8xf32>
    %47 = vector.shape_cast %46 : vector<8xf32> to vector<8x1xf32>
    %cst_27 = arith.constant 3.906250e-03 : f32
    %48 = vector.broadcast %cst_27 : f32 to vector<8x1xf32>
    %49 = arith.mulf %47, %48 : vector<8x1xf32>
    %50 = vector.broadcast %49 : vector<8x1xf32> to vector<8x256xf32>
    %51 = arith.subf %45, %50 : vector<8x256xf32>
    %52 = arith.mulf %51, %51 : vector<8x256xf32>
    %cst_28 = arith.constant dense<0.000000e+00> : vector<8xf32>
    %53 = vector.multi_reduction <add>, %52, %cst_28 [1] : vector<8x256xf32> to vector<8xf32>
    %54 = vector.shape_cast %53 : vector<8xf32> to vector<8x1xf32>
    %cst_29 = arith.constant 3.906250e-03 : f32
    %55 = vector.broadcast %cst_29 : f32 to vector<8x1xf32>
    %56 = arith.mulf %54, %55 : vector<8x1xf32>
    %cst_30 = arith.constant 9.99999974E-6 : f32
    %57 = vector.broadcast %cst_30 : f32 to vector<8x1xf32>
    %58 = arith.addf %56, %57 : vector<8x1xf32>
    %59 = math.rsqrt %58 : vector<8x1xf32>
    %60 = vector.broadcast %59 : vector<8x1xf32> to vector<8x256xf32>
    %61 = arith.mulf %51, %60 : vector<8x256xf32>
    %c17_i32_31 = arith.constant 17 : i32
    %62 = tpu.dynamic_rotate %61 by %c17_i32_31 dim 1 : vector<8x256xf32>, i32 -> vector<8x256xf32>
    %c0_32 = arith.constant 0 : index
    %c0_33 = arith.constant 0 : index
    %63 = vector.load %arg2[%c0_32, %c0_33] : memref<9x256xf32, #tpu.memory_space<vmem>>, vector<1x256xf32>
    %64 = vector.broadcast %63 : vector<1x256xf32> to vector<8x256xf32>
    %65 = arith.mulf %62, %64 : vector<8x256xf32>
    %c0_34 = arith.constant 0 : index
    %c0_35 = arith.constant 0 : index
    %66 = vector.load %arg7[%c0_34, %c0_35] : memref<72x256xf32, #tpu.memory_space<vmem>>, vector<8x256xf32>
    tpu.vector_store %arg7[%c0_34, %c0_35], %65 {strides = array<i32>} : memref<72x256xf32, #tpu.memory_space<vmem>>, vector<8x256xf32>,
    %c16_i32_36 = arith.constant 16 : i32
    %67 = tpu.dynamic_rotate %61 by %c16_i32_36 dim 1 : vector<8x256xf32>, i32 -> vector<8x256xf32>
    %c1_37 = arith.constant 1 : index
    %c0_38 = arith.constant 0 : index
    %68 = vector.load %arg2[%c1_37, %c0_38] : memref<9x256xf32, #tpu.memory_space<vmem>>, vector<1x256xf32>
    %69 = vector.broadcast %68 : vector<1x256xf32> to vector<8x256xf32>
    %70 = arith.mulf %67, %69 : vector<8x256xf32>
    %c8_39 = arith.constant 8 : index
    %c0_40 = arith.constant 0 : index
    %71 = vector.load %arg7[%c8_39, %c0_40] : memref<72x256xf32, #tpu.memory_space<vmem>>, vector<8x256xf32>
    tpu.vector_store %arg7[%c8_39, %c0_40], %70 {strides = array<i32>} : memref<72x256xf32, #tpu.memory_space<vmem>>, vector<8x256xf32>,
    %c15_i32_41 = arith.constant 15 : i32
    %72 = tpu.dynamic_rotate %61 by %c15_i32_41 dim 1 : vector<8x256xf32>, i32 -> vector<8x256xf32>
    %c2_42 = arith.constant 2 : index
    %c0_43 = arith.constant 0 : index
    %73 = vector.load %arg2[%c2_42, %c0_43] : memref<9x256xf32, #tpu.memory_space<vmem>>, vector<1x256xf32>
    %74 = vector.broadcast %73 : vector<1x256xf32> to vector<8x256xf32>
    %75 = arith.mulf %72, %74 : vector<8x256xf32>
    %c16_44 = arith.constant 16 : index
    %c0_45 = arith.constant 0 : index
    %76 = vector.load %arg7[%c16_44, %c0_45] : memref<72x256xf32, #tpu.memory_space<vmem>>, vector<8x256xf32>
    tpu.vector_store %arg7[%c16_44, %c0_45], %75 {strides = array<i32>} : memref<72x256xf32, #tpu.memory_space<vmem>>, vector<8x256xf32>,
    %c1_i32_46 = arith.constant 1 : i32
    %77 = tpu.dynamic_rotate %61 by %c1_i32_46 dim 1 : vector<8x256xf32>, i32 -> vector<8x256xf32>
    %c3_47 = arith.constant 3 : index
    %c0_48 = arith.constant 0 : index
    %78 = vector.load %arg2[%c3_47, %c0_48] : memref<9x256xf32, #tpu.memory_space<vmem>>, vector<1x256xf32>
    %79 = vector.broadcast %78 : vector<1x256xf32> to vector<8x256xf32>
    %80 = arith.mulf %77, %79 : vector<8x256xf32>
    %c24_49 = arith.constant 24 : index
    %c0_50 = arith.constant 0 : index
    %81 = vector.load %arg7[%c24_49, %c0_50] : memref<72x256xf32, #tpu.memory_space<vmem>>, vector<8x256xf32>
    tpu.vector_store %arg7[%c24_49, %c0_50], %80 {strides = array<i32>} : memref<72x256xf32, #tpu.memory_space<vmem>>, vector<8x256xf32>,
    %c32_51 = arith.constant 32 : index
    %c0_52 = arith.constant 0 : index
    %82 = vector.load %arg7[%c32_51, %c0_52] : memref<72x256xf32, #tpu.memory_space<vmem>>, vector<8x256xf32>
    tpu.vector_store %arg7[%c32_51, %c0_52], %61 {strides = array<i32>} : memref<72x256xf32, #tpu.memory_space<vmem>>, vector<8x256xf32>,
    %c255_i32_53 = arith.constant 255 : i32
    %83 = tpu.dynamic_rotate %61 by %c255_i32_53 dim 1 : vector<8x256xf32>, i32 -> vector<8x256xf32>
    %c5_54 = arith.constant 5 : index
    %c0_55 = arith.constant 0 : index
    %84 = vector.load %arg2[%c5_54, %c0_55] : memref<9x256xf32, #tpu.memory_space<vmem>>, vector<1x256xf32>
    %85 = vector.broadcast %84 : vector<1x256xf32> to vector<8x256xf32>
    %86 = arith.mulf %83, %85 : vector<8x256xf32>
    %c40 = arith.constant 40 : index
    %c0_56 = arith.constant 0 : index
    %87 = vector.load %arg7[%c40, %c0_56] : memref<72x256xf32, #tpu.memory_space<vmem>>, vector<8x256xf32>
    tpu.vector_store %arg7[%c40, %c0_56], %86 {strides = array<i32>} : memref<72x256xf32, #tpu.memory_space<vmem>>, vector<8x256xf32>,
    %c241_i32_57 = arith.constant 241 : i32
    %88 = tpu.dynamic_rotate %61 by %c241_i32_57 dim 1 : vector<8x256xf32>, i32 -> vector<8x256xf32>
    %c6_58 = arith.constant 6 : index
    %c0_59 = arith.constant 0 : index
    %89 = vector.load %arg2[%c6_58, %c0_59] : memref<9x256xf32, #tpu.memory_space<vmem>>, vector<1x256xf32>
    %90 = vector.broadcast %89 : vector<1x256xf32> to vector<8x256xf32>
    %91 = arith.mulf %88, %90 : vector<8x256xf32>
    %c48 = arith.constant 48 : index
    %c0_60 = arith.constant 0 : index
    %92 = vector.load %arg7[%c48, %c0_60] : memref<72x256xf32, #tpu.memory_space<vmem>>, vector<8x256xf32>
    tpu.vector_store %arg7[%c48, %c0_60], %91 {strides = array<i32>} : memref<72x256xf32, #tpu.memory_space<vmem>>, vector<8x256xf32>,
    %c240_i32_61 = arith.constant 240 : i32
    %93 = tpu.dynamic_rotate %61 by %c240_i32_61 dim 1 : vector<8x256xf32>, i32 -> vector<8x256xf32>
    %c7_62 = arith.constant 7 : index
    %c0_63 = arith.constant 0 : index
    %94 = vector.load %arg2[%c7_62, %c0_63] : memref<9x256xf32, #tpu.memory_space<vmem>>, vector<1x256xf32>
    %95 = vector.broadcast %94 : vector<1x256xf32> to vector<8x256xf32>
    %96 = arith.mulf %93, %95 : vector<8x256xf32>
    %c56 = arith.constant 56 : index
    %c0_64 = arith.constant 0 : index
    %97 = vector.load %arg7[%c56, %c0_64] : memref<72x256xf32, #tpu.memory_space<vmem>>, vector<8x256xf32>
    tpu.vector_store %arg7[%c56, %c0_64], %96 {strides = array<i32>} : memref<72x256xf32, #tpu.memory_space<vmem>>, vector<8x256xf32>,
    %c239_i32_65 = arith.constant 239 : i32
    %98 = tpu.dynamic_rotate %61 by %c239_i32_65 dim 1 : vector<8x256xf32>, i32 -> vector<8x256xf32>
    %c8_66 = arith.constant 8 : index
    %c0_67 = arith.constant 0 : index
    %99 = vector.load %arg2[%c8_66, %c0_67] : memref<9x256xf32, #tpu.memory_space<vmem>>, vector<1x256xf32>
    %100 = vector.broadcast %99 : vector<1x256xf32> to vector<8x256xf32>
    %101 = arith.mulf %98, %100 : vector<8x256xf32>
    %c64 = arith.constant 64 : index
    %c0_68 = arith.constant 0 : index
    %102 = vector.load %arg7[%c64, %c0_68] : memref<72x256xf32, #tpu.memory_space<vmem>>, vector<8x256xf32>
    tpu.vector_store %arg7[%c64, %c0_68], %101 {strides = array<i32>} : memref<72x256xf32, #tpu.memory_space<vmem>>, vector<8x256xf32>,
    %c0_69 = arith.constant 0 : index
    %c0_70 = arith.constant 0 : index
    %103 = vector.load %arg4[%c0_69, %c0_70] : memref<8x72xf32, #tpu.memory_space<vmem>>, vector<8x72xf32>
    %c0_71 = arith.constant 0 : index
    %c0_72 = arith.constant 0 : index
    %104 = vector.load %arg7[%c0_71, %c0_72] : memref<72x256xf32, #tpu.memory_space<vmem>>, vector<72x256xf32>
    %cst_73 = arith.constant dense<0.000000e+00> : vector<8x256xf32>
    %105 = tpu.matmul %103, %104, %cst_73 {dimension_numbers = #tpu.dot_dimension_numbers<[1], [0], [0], [1], [0, 0, 1, 1], [], []>} : vector<8x72xf32>, vector<72x256xf32>, vector<8x256xf32> -> vector<8x256xf32>
    %cst_74 = arith.constant dense<0.000000e+00> : vector<8xf32>
    %106 = vector.multi_reduction <add>, %105, %cst_74 [1] : vector<8x256xf32> to vector<8xf32>
    %107 = vector.shape_cast %106 : vector<8xf32> to vector<8x1xf32>
    %cst_75 = arith.constant 3.906250e-03 : f32
    %108 = vector.broadcast %cst_75 : f32 to vector<8x1xf32>
    %109 = arith.mulf %107, %108 : vector<8x1xf32>
    %110 = vector.broadcast %109 : vector<8x1xf32> to vector<8x256xf32>
    %111 = arith.subf %105, %110 : vector<8x256xf32>
    %112 = arith.mulf %111, %111 : vector<8x256xf32>
    %cst_76 = arith.constant dense<0.000000e+00> : vector<8xf32>
    %113 = vector.multi_reduction <add>, %112, %cst_76 [1] : vector<8x256xf32> to vector<8xf32>
    %114 = vector.shape_cast %113 : vector<8xf32> to vector<8x1xf32>
    %cst_77 = arith.constant 3.906250e-03 : f32
    %115 = vector.broadcast %cst_77 : f32 to vector<8x1xf32>
    %116 = arith.mulf %114, %115 : vector<8x1xf32>
    %cst_78 = arith.constant 9.99999974E-6 : f32
    %117 = vector.broadcast %cst_78 : f32 to vector<8x1xf32>
    %118 = arith.addf %116, %117 : vector<8x1xf32>
    %119 = math.rsqrt %118 : vector<8x1xf32>
    %120 = vector.broadcast %119 : vector<8x1xf32> to vector<8x256xf32>
    %121 = arith.mulf %111, %120 : vector<8x256xf32>
    %c0_79 = arith.constant 0 : index
    %c0_80 = arith.constant 0 : index
    %c0_81 = arith.constant 0 : index
    %122 = vector.load %arg5[%c0_79, %c0_80, %c0_81] : memref<1x8x256xf32, #tpu.memory_space<vmem>>, vector<1x8x256xf32>
    %123 = vector.shape_cast %122 : vector<1x8x256xf32> to vector<8x256xf32>
    %124 = vector.shape_cast %121 : vector<8x256xf32> to vector<1x8x256xf32>
    tpu.vector_store %arg5[%c0_79, %c0_80, %c0_81], %124 {strides = array<i32>} : memref<1x8x256xf32, #tpu.memory_space<vmem>>, vector<1x8x256xf32>,
    return
  }
  func.func @transform_0(%arg0: i32) -> (i32, i32, i32) {
    %c0_i32 = arith.constant 0 : i32
    %c0_i32_0 = arith.constant 0 : i32
    %c0_i32_1 = arith.constant 0 : i32
    return %arg0, %c0_i32, %c0_i32_0 : i32, i32, i32
  }
  func.func @transform_1(%arg0: i32) -> (i32, i32) {
    %c0_i32 = arith.constant 0 : i32
    %c0_i32_0 = arith.constant 0 : i32
    %c0_i32_1 = arith.constant 0 : i32
    return %c0_i32, %c0_i32_0 : i32, i32
  }
  func.func @transform_2(%arg0: i32) -> (i32, i32) {
    %c0_i32 = arith.constant 0 : i32
    %c0_i32_0 = arith.constant 0 : i32
    %c0_i32_1 = arith.constant 0 : i32
    return %c0_i32, %c0_i32_0 : i32, i32
  }
  func.func @transform_3(%arg0: i32) -> (i32, i32) {
    %c0_i32 = arith.constant 0 : i32
    %c0_i32_0 = arith.constant 0 : i32
    %c0_i32_1 = arith.constant 0 : i32
    return %c0_i32, %c0_i32_0 : i32, i32
  }
  func.func @transform_4(%arg0: i32) -> (i32, i32, i32) {
    %c0_i32 = arith.constant 0 : i32
    %c0_i32_0 = arith.constant 0 : i32
    %c0_i32_1 = arith.constant 0 : i32
    return %arg0, %c0_i32, %c0_i32_0 : i32, i32, i32
  }
}

</mosaic_0001>

<llo_original>
// kernel: tpu_custom_call.1
$region0: #{tpu_custom_call.1}
  #allocation0 [shape = 'u32[]', space=smem, size = 0x4, offset = 0x4, fixed_abs, tag = 'smem constant byte address 0x4 - core index']
  #allocation1 [shape = 'u32[144,128]{1,0:T(1,128)}', space=vmem, size = 0x12000, scoped, tag = 'internal scratch']
  #allocation2 [shape = 'f32[36,256]{1,0:T(8,128)}', space=vmem, size = 0xa000, scoped, tag = 'scratch operand']
  #allocation3 [shape = 'f32[72,256]{1,0:T(8,128)}', space=vmem, size = 0x12000, scoped, tag = 'scratch operand']
  %s0 = inlined_call_operand.hbm [shape: f32[2,4,256], index: 0, kind: input, shape index: {}]
  %s1 = inlined_call_operand.hbm [shape: f32[9,256], index: 1, kind: input, shape index: {}]
  %s2 = inlined_call_operand.hbm [shape: f32[8,36], index: 2, kind: input, shape index: {}]
  %s3 = inlined_call_operand.hbm [shape: f32[8,72], index: 3, kind: input, shape index: {}]
  %s4 = inlined_call_operand.hbm [shape: f32[2,8,256], index: 4, kind: output, shape index: {}]
  %s5 = sld [smem:[#allocation0]]
  $region65: #{tpu_custom_call.1} parent=0
    _
  %s7 = ssub.s32 1, %s5
  %s8 = scalar_select 0, %s7, %s5
  $region1: #{tpu_custom_call.1} parent=0
    #allocation4 [shape = 'u8[8192]{0}', space=vmem, size = 0x2000, scoped, tag = 'input window, operand 0']
    #allocation5 [shape = 's32[2]{0}', space=sflag, size = 0x8, scoped, tag = 'scoped memory for tpu_custom_call.1']
    #allocation6 [shape = 's32[2]{0}', space=sflag, size = 0x8, scoped, tag = 'scoped memory for tpu_custom_call.1']
    #allocation7 [shape = 'u8[16384]{0}', space=vmem, size = 0x4000, scoped, tag = 'input window, operand 1, single buffered']
    #allocation8 [shape = 's32[1]{0}', space=sflag, size = 0x4, scoped, tag = 'scoped memory for tpu_custom_call.1']
    #allocation9 [shape = 'u8[4096]{0}', space=vmem, size = 0x1000, scoped, tag = 'input window, operand 2, single buffered']
    #allocation10 [shape = 'u8[4096]{0}', space=vmem, size = 0x1000, scoped, tag = 'input window, operand 3, single buffered']
    #allocation11 [shape = 's32[1]{0}', space=sflag, size = 0x4, scoped, tag = 'scoped memory for tpu_custom_call.1']
    #allocation12 [shape = 'u8[16384]{0}', space=vmem, size = 0x4000, scoped, tag = 'output window, operand 0']
    %9 = vsyncpa [#allocation5], 0
    %s10 = scalar_lea.sflag [#allocation5], 1
    %11 = vsyncpa %s10, 0
    %12 = vsyncpa [#allocation8], 0
    %13 = vsyncpa [#allocation11], 0
    %14 = vsyncpa [#allocation6], 0
    %s15 = scalar_lea.sflag [#allocation6], 1
    %16 = vsyncpa %s15, 0
    loop: start=0, step=1, limit=4
    $region2: #{tpu_custom_call.1} parent=1 // loop_pre_header
      _
    $region3: #{tpu_custom_call.1} parent=1 // loop_header
      %s18 = sphi 0, %s22
      %p19 = scmp.ge.s32.totalorder %s18, 4
      %s28 = sphi 0, %s30
      %s31 = sphi 0, %s28
      %s32 = sphi 0, %s31
      %s48 = sphi 0, %s32
      %s52 = sphi 0, %s52
      %s54 = sphi 0, %s52
      %s55 = sphi 0, %s54
      %s69 = sphi 0, %s55
      %s73 = sphi 0, %s73
      %s75 = sphi 0, %s73
      %s76 = sphi 0, %s75
      %s90 = sphi 0, %s76
      %s94 = sphi 0, %s94
      %s96 = sphi 0, %s94
      %s97 = sphi 0, %s96
      %s111 = sphi 0, %s97
      %s117 = sphi 0, %s119
      %s120 = sphi 0, %s117
      %s121 = sphi 0, %s120
      %s137 = sphi 0, %s121
    $region4: #{tpu_custom_call.1} parent=1 // loop_header_branch
      %21 = sbr.rel (%p19) target = $region8
    $region5: #{tpu_custom_call.1} parent=1 // loop_body
      %s23 = ssub.s32 %s18, 1
      %s24 = ssub.s32 %s18, 2
      %s25 = sadd.s32 %s18, 1
      %s26 = ssub.s32 %s18, %s25
      %p27 = scmp.eq.s32.totalorder %s26, 0
      %s29 = sadd.s32 %s28, 1
      %s30 = scalar_select %p27, %s28, %s29
      %p33 = pneg %p27
      %p34 = scmp.eq.s32.totalorder %s18, 1
      %p35 = por %p33, %p34
      %p36 = scmp.ne.s32.totalorder %s28, %s31
      %p37 = scmp.eq.s32.totalorder %s18, 0
      %p38 = por %p36, %p37
      %p39 = scmp.ne.s32.totalorder %s28, %s31
      %p40 = scmp.eq.s32.totalorder %s23, 1
      %p41 = por %p39, %p40
      %p42 = scmp.ne.s32.totalorder %s31, %s32
      %p43 = scmp.eq.s32.totalorder %s23, 0
      %p44 = por %p42, %p43
      %p45 = scmp.ne.s32.totalorder %s31, %s32
      %p46 = scmp.eq.s32.totalorder %s24, 1
      %p47 = por %p45, %p46
      %p49 = scmp.ne.s32.totalorder %s32, %s48
      %p50 = scmp.eq.s32.totalorder %s24, 0
      %p51 = por %p49, %p50
      %s53 = sadd.s32 %s52, 1
      %p56 = scmp.eq.s32.totalorder %s18, 1
      %p57 = scmp.ne.s32.totalorder %s52, %s54
      %p58 = scmp.eq.s32.totalorder %s18, 0
      %p59 = por %p57, %p58
      %p60 = scmp.ne.s32.totalorder %s52, %s54
      %p61 = scmp.eq.s32.totalorder %s23, 1
      %p62 = por %p60, %p61
      %p63 = scmp.ne.s32.totalorder %s54, %s55
      %p64 = scmp.eq.s32.totalorder %s23, 0
      %p65 = por %p63, %p64
      %p66 = scmp.ne.s32.totalorder %s54, %s55
      %p67 = scmp.eq.s32.totalorder %s24, 1
      %p68 = por %p66, %p67
      %p70 = scmp.ne.s32.totalorder %s55, %s69
      %p71 = scmp.eq.s32.totalorder %s24, 0
      %p72 = por %p70, %p71
      %s74 = sadd.s32 %s73, 1
      %p77 = scmp.eq.s32.totalorder %s18, 1
      %p78 = scmp.ne.s32.totalorder %s73, %s75
      %p79 = scmp.eq.s32.totalorder %s18, 0
      %p80 = por %p78, %p79
      %p81 = scmp.ne.s32.totalorder %s73, %s75
      %p82 = scmp.eq.s32.totalorder %s23, 1
      %p83 = por %p81, %p82
      %p84 = scmp.ne.s32.totalorder %s75, %s76
      %p85 = scmp.eq.s32.totalorder %s23, 0
      %p86 = por %p84, %p85
      %p87 = scmp.ne.s32.totalorder %s75, %s76
      %p88 = scmp.eq.s32.totalorder %s24, 1
      %p89 = por %p87, %p88
      %p91 = scmp.ne.s32.totalorder %s76, %s90
      %p92 = scmp.eq.s32.totalorder %s24, 0
      %p93 = por %p91, %p92
      %s95 = sadd.s32 %s94, 1
      %p98 = scmp.eq.s32.totalorder %s18, 1
      %p99 = scmp.ne.s32.totalorder %s94, %s96
      %p100 = scmp.eq.s32.totalorder %s18, 0
      %p101 = por %p99, %p100
      %p102 = scmp.ne.s32.totalorder %s94, %s96
      %p103 = scmp.eq.s32.totalorder %s23, 1
      %p104 = por %p102, %p103
      %p105 = scmp.ne.s32.totalorder %s96, %s97
      %p106 = scmp.eq.s32.totalorder %s23, 0
      %p107 = por %p105, %p106
      %p108 = scmp.ne.s32.totalorder %s96, %s97
      %p109 = scmp.eq.s32.totalorder %s24, 1
      %p110 = por %p108, %p109
      %p112 = scmp.ne.s32.totalorder %s97, %s111
      %p113 = scmp.eq.s32.totalorder %s24, 0
      %p114 = por %p112, %p113
      %s115 = ssub.s32 %s18, %s25
      %p116 = scmp.eq.s32.totalorder %s115, 0
      %s118 = sadd.s32 %s117, 1
      %s119 = scalar_select %p116, %s117, %s118
      %p122 = pneg %p116
      %p123 = scmp.eq.s32.totalorder %s18, 1
      %p124 = por %p122, %p123
      %p125 = scmp.ne.s32.totalorder %s117, %s120
      %p126 = scmp.eq.s32.totalorder %s18, 0
      %p127 = por %p125, %p126
      %p128 = scmp.ne.s32.totalorder %s117, %s120
      %p129 = scmp.eq.s32.totalorder %s23, 1
      %p130 = por %p128, %p129
      %p131 = scmp.ne.s32.totalorder %s120, %s121
      %p132 = scmp.eq.s32.totalorder %s23, 0
      %p133 = por %p131, %p132
      %p134 = scmp.ne.s32.totalorder %s120, %s121
      %p135 = scmp.eq.s32.totalorder %s24, 1
      %p136 = por %p134, %p135
      %p138 = scmp.ne.s32.totalorder %s121, %s137
      %p139 = scmp.eq.s32.totalorder %s24, 0
      %p140 = por %p138, %p139
      %p141 = scmp.le.s32.totalorder 1, %s18
      %p142 = scmp.lt.s32.totalorder %s18, 3
      %p143 = pnand %p141, %p142
      %p144 = pneg %p143
      // Predicated region
      $region9: #{tpu_custom_call.1} parent=5 // pred_check
        _
      $region10: #{tpu_custom_call.1} parent=5 // pred_check_branch
        %146 = sbr.rel (%p143) target = $region12
      $region11: #{tpu_custom_call.1} parent=5 // pred_region
        %s147 = ssub.s32 %s18, 1
        // Predicated region
        $region13: #{tpu_custom_call.1} parent=11 // pred_check
          %p148 = pneg %p65
        $region14: #{tpu_custom_call.1} parent=11 // pred_check_branch
          %150 = sbr.rel (%p148) target = $region16
        $region15: #{tpu_custom_call.1} parent=11 // pred_region
          %s152 = ssub.s32 512, 512
          %153 = vsyncadd [#allocation8], %s152
          %s154 = sshll.u32 [#allocation7], 4
          %s155 = int_to_ptr.vmem [resolvable:$true] %s154
          %160 = dma.hbm_to_vmem [thread:$0]  %s1, 512, %s155, [#allocation8], 256, 256, 16
        $region16: #{tpu_custom_call.1} parent=11 // pred_fallthru
          _
        // Predicated region
        $region17: #{tpu_custom_call.1} parent=11 // pred_check
          %p161 = pneg %p86
        $region18: #{tpu_custom_call.1} parent=11 // pred_check_branch
          %163 = sbr.rel (%p161) target = $region20
        $region19: #{tpu_custom_call.1} parent=11 // pred_region
          %s165 = ssub.s32 128, 128
          %166 = vsyncadd [#allocation8], %s165
          %s168 = sshll.u32 [#allocation9], 4
          %s169 = int_to_ptr.vmem [resolvable:$true] %s168
          %171 = dma.hbm_to_vmem [thread:$0]  %s2, 128, %s169, [#allocation8]
        $region20: #{tpu_custom_call.1} parent=11 // pred_fallthru
          _
        // Predicated region
        $region21: #{tpu_custom_call.1} parent=11 // pred_check
          %p172 = pneg %p107
        $region22: #{tpu_custom_call.1} parent=11 // pred_check_branch
          %174 = sbr.rel (%p172) target = $region24
        $region23: #{tpu_custom_call.1} parent=11 // pred_region
          %s176 = ssub.s32 128, 128
          %177 = vsyncadd [#allocation11], %s176
          %s179 = sshll.u32 [#allocation10], 4
          %s180 = int_to_ptr.vmem [resolvable:$true] %s179
          %182 = dma.hbm_to_vmem [thread:$0]  %s3, 128, %s180, [#allocation11]
        $region24: #{tpu_custom_call.1} parent=11 // pred_fallthru
          _
      $region12: #{tpu_custom_call.1} parent=5 // pred_fallthru
        _
      %p183 = scmp.lt.s32.totalorder %s18, 2
      // Predicated region
      $region25: #{tpu_custom_call.1} parent=5 // pred_check
        %p184 = pneg %p183
      $region26: #{tpu_custom_call.1} parent=5 // pred_check_branch
        %186 = sbr.rel (%p184) target = $region28
      $region27: #{tpu_custom_call.1} parent=5 // pred_region
        // Predicated region
        $region29: #{tpu_custom_call.1} parent=27 // pred_check
          %p187 = pneg %p38
        $region30: #{tpu_custom_call.1} parent=27 // pred_check_branch
          %189 = sbr.rel (%p187) target = $region32
        $region31: #{tpu_custom_call.1} parent=27 // pred_region
          %s190 = sand.u32 %s28, 1
          %s191 = scalar_lea.sflag [#allocation5], %s190
          %s192 = sand.u32 %s28, 1
          %s193 = smul.addr %s192, 8
          %s194 = scalar_lea.vmem [#allocation4], %s193
          %s196 = ssub.s32 128, 128
          %197 = vsyncadd %s191, %s196
          %s198 = smul.addr %s18, 2
          %s199 = smul.addr %s198, 64
          %s200 = scalar_lea.hbm %s0, %s199
          %s202 = sshll.u32 %s194, 4
          %s203 = int_to_ptr.vmem [resolvable:$true] %s202
          %205 = dma.hbm_to_vmem [thread:$0]  %s200, 128, %s203, %s191
        $region32: #{tpu_custom_call.1} parent=27 // pred_fallthru
          _
      $region28: #{tpu_custom_call.1} parent=5 // pred_fallthru
        _
      %p206 = scmp.le.s32.totalorder 1, %s18
      %p207 = scmp.lt.s32.totalorder %s18, 3
      %p208 = pnand %p206, %p207
      %p209 = pneg %p208
      // Predicated region
      $region33: #{tpu_custom_call.1} parent=5 // pred_check
        _
      $region34: #{tpu_custom_call.1} parent=5 // pred_check_branch
        %211 = sbr.rel (%p208) target = $region36
      $region35: #{tpu_custom_call.1} parent=5 // pred_region
        %s212 = ssub.s32 %s18, 1
        %s213 = sand.u32 %s31, 1
        %s214 = scalar_lea.sflag [#allocation5], %s213
        %s215 = sand.u32 %s31, 1
        %s216 = smul.addr %s215, 8
        %s217 = scalar_lea.vmem [#allocation4], %s216
        // Predicated region
        $region37: #{tpu_custom_call.1} parent=35 // pred_check
          %p218 = pneg %p44
        $region38: #{tpu_custom_call.1} parent=35 // pred_check_branch
          %220 = sbr.rel (%p218) target = $region40
        $region39: #{tpu_custom_call.1} parent=35 // pred_region
          %221 = dma.done %s214, 128
        $region40: #{tpu_custom_call.1} parent=35 // pred_fallthru
          _
        // Predicated region
        $region41: #{tpu_custom_call.1} parent=35 // pred_check
          %p222 = pneg %p65
        $region42: #{tpu_custom_call.1} parent=35 // pred_check_branch
          %224 = sbr.rel (%p222) target = $region44
        $region43: #{tpu_custom_call.1} parent=35 // pred_region
          %225 = dma.done [#allocation8], 512
        $region44: #{tpu_custom_call.1} parent=35 // pred_fallthru
          _
        // Predicated region
        $region45: #{tpu_custom_call.1} parent=35 // pred_check
          %p226 = pneg %p86
        $region46: #{tpu_custom_call.1} parent=35 // pred_check_branch
          %228 = sbr.rel (%p226) target = $region48
        $region47: #{tpu_custom_call.1} parent=35 // pred_region
          %229 = dma.done [#allocation8], 128
        $region48: #{tpu_custom_call.1} parent=35 // pred_fallthru
          _
        // Predicated region
        $region49: #{tpu_custom_call.1} parent=35 // pred_check
          %p230 = pneg %p107
        $region50: #{tpu_custom_call.1} parent=35 // pred_check_branch
          %232 = sbr.rel (%p230) target = $region52
        $region51: #{tpu_custom_call.1} parent=35 // pred_region
          %233 = dma.done [#allocation11], 128
        $region52: #{tpu_custom_call.1} parent=35 // pred_fallthru
          _
        %s234 = sand.u32 %s31, 1
        %s235 = scalar_lea.sflag [#allocation5], %s234
        %s236 = sand.u32 %s31, 1
        %s237 = smul.addr %s236, 8
        %s238 = scalar_lea.vmem [#allocation4], %s237
        %p239 = pneg %p44
        %p240 = pneg %p41
        %p241 = pneg %p65
        %p242 = pneg %p62
        %p243 = pneg %p86
        %p244 = pneg %p83
        %p245 = pneg %p107
        %p246 = pneg %p104
        %p247 = pneg %p133
        %p248 = pneg %p130
        %s249 = sand.u32 %s120, 1
        %s250 = scalar_lea.sflag [#allocation6], %s249
        %s251 = sand.u32 %s120, 1
        %s252 = smul.addr %s251, 16
        %s253 = scalar_lea.vmem [#allocation12], %s252
        %v254 = vld [vmem:[%s217] sm:$0xff]
        %v256 = vcombine.high %v254, %v254
        %258 = vrot.lane.b32.xlu0 %v254, 17
        %v259 = vpop.permute.xlu0 %258
        %260 = vrot.lane.b32.xlu0 %v256, 17
        %v261 = vpop.permute.xlu0 %260
        %v262 = vlaneseq
        %v263 = vand.u32 %v262, 127
        %vm264 = vcmp.lt.s32.totalorder %v263, 17
        %v265 = vsel %vm264, %v259, %v261
        %v266 = vsel %vm264, %v261, %v259
        %v267 = vld [vmem:[#allocation7] ss:$8 sm:$0x3]
        %v269 = vlaneseq
        %v270 = vshrl.u32 %v269, 7
        %v271 = vsub.s32 0, %v270
        %v272 = vrot.slane %v267, %v271
        %v273 = vlaneseq
        %v274 = vshrl.u32 %v273, 7
        %v275 = vsub.s32 1, %v274
        %v276 = vrot.slane %v267, %v275
        %v279 = vmul.f32 %v266, %v272
        %v280 = vmul.f32 %v265, %v276
        %281 = vst [vmem:[#allocation2] sm:$0xf] %v279
        %282 = vst [vmem:[#allocation2 + $0x8] sm:$0xf] %v280
        %283 = vrot.lane.b32.xlu0 %v254, 16
        %v284 = vpop.permute.xlu0 %283
        %285 = vrot.lane.b32.xlu0 %v256, 16
        %v286 = vpop.permute.xlu0 %285
        %vm287 = vcmp.lt.s32.totalorder %v263, 16
        %v288 = vsel %vm287, %v284, %v286
        %v289 = vsel %vm287, %v286, %v284
        %s290 = scalar_lea.vmem [#allocation7], 1
        %v291 = vld [vmem:[%s290] ss:$8 sm:$0x3]
        %v293 = vlaneseq
        %v294 = vshrl.u32 %v293, 7
        %v295 = vsub.s32 0, %v294
        %v296 = vrot.slane %v291, %v295
        %v297 = vlaneseq
        %v298 = vshrl.u32 %v297, 7
        %v299 = vsub.s32 1, %v298
        %v300 = vrot.slane %v291, %v299
        %v303 = vmul.f32 %v289, %v296
        %v304 = vmul.f32 %v288, %v300
        %v307 = vrot.slane %v303, 4
        %v308 = vrot.slane %v304, 4
        %311 = vst [vmem:[#allocation2] sm:$0xf0] %v307
        %312 = vst [vmem:[#allocation2 + $0x8] sm:$0xf0] %v308
        %313 = vrot.lane.b32.xlu0 %v254, 15
        %v314 = vpop.permute.xlu0 %313
        %315 = vrot.lane.b32.xlu0 %v256, 15
        %v316 = vpop.permute.xlu0 %315
        %vm317 = vcmp.lt.s32.totalorder %v263, 15
        %v318 = vsel %vm317, %v314, %v316
        %v319 = vsel %vm317, %v316, %v314
        %s320 = scalar_lea.vmem [#allocation7], 2
        %v321 = vld [vmem:[%s320] ss:$8 sm:$0x3]
        %v323 = vlaneseq
        %v324 = vshrl.u32 %v323, 7
        %v325 = vsub.s32 0, %v324
        %v326 = vrot.slane %v321, %v325
        %v327 = vlaneseq
        %v328 = vshrl.u32 %v327, 7
        %v329 = vsub.s32 1, %v328
        %v330 = vrot.slane %v321, %v329
        %v333 = vmul.f32 %v319, %v326
        %v334 = vmul.f32 %v318, %v330
        %335 = vst [vmem:[#allocation2 + $0x10] sm:$0xf] %v333
        %336 = vst [vmem:[#allocation2 + $0x18] sm:$0xf] %v334
        %337 = vrot.lane.b32.xlu0 %v254, 1
        %v338 = vpop.permute.xlu0 %337
        %339 = vrot.lane.b32.xlu0 %v256, 1
        %v340 = vpop.permute.xlu0 %339
        %vm341 = vcmp.lt.s32.totalorder %v263, 1
        %v342 = vsel %vm341, %v338, %v340
        %v343 = vsel %vm341, %v340, %v338
        %s344 = scalar_lea.vmem [#allocation7], 3
        %v345 = vld [vmem:[%s344] ss:$8 sm:$0x3]
        %v347 = vlaneseq
        %v348 = vshrl.u32 %v347, 7
        %v349 = vsub.s32 0, %v348
        %v350 = vrot.slane %v345, %v349
        %v351 = vlaneseq
        %v352 = vshrl.u32 %v351, 7
        %v353 = vsub.s32 1, %v352
        %v354 = vrot.slane %v345, %v353
        %v357 = vmul.f32 %v343, %v350
        %v358 = vmul.f32 %v342, %v354
        %v361 = vrot.slane %v357, 4
        %v362 = vrot.slane %v358, 4
        %365 = vst [vmem:[#allocation2 + $0x10] sm:$0xf0] %v361
        %366 = vst [vmem:[#allocation2 + $0x18] sm:$0xf0] %v362
        %367 = vst [vmem:[#allocation2 + $0x20] sm:$0xf] %v254
        %368 = vst [vmem:[#allocation2 + $0x28] sm:$0xf] %v256
        %369 = vrot.lane.b32.xlu0 %v254, 127
        %v370 = vpop.permute.xlu0 %369
        %371 = vrot.lane.b32.xlu0 %v256, 127
        %v372 = vpop.permute.xlu0 %371
        %vm373 = vcmp.lt.s32.totalorder %v263, 127
        %v374 = vsel %vm373, %v370, %v372
        %v375 = vsel %vm373, %v372, %v370
        %s376 = scalar_lea.vmem [#allocation7], 5
        %v377 = vld [vmem:[%s376] ss:$8 sm:$0x3]
        %v379 = vlaneseq
        %v380 = vshrl.u32 %v379, 7
        %v381 = vsub.s32 0, %v380
        %v382 = vrot.slane %v377, %v381
        %v383 = vlaneseq
        %v384 = vshrl.u32 %v383, 7
        %v385 = vsub.s32 1, %v384
        %v386 = vrot.slane %v377, %v385
        %v389 = vmul.f32 %v374, %v382
        %v390 = vmul.f32 %v375, %v386
        %v393 = vrot.slane %v389, 4
        %v394 = vrot.slane %v390, 4
        %397 = vst [vmem:[#allocation2 + $0x20] sm:$0xf0] %v393
        %398 = vst [vmem:[#allocation2 + $0x28] sm:$0xf0] %v394
        %399 = vrot.lane.b32.xlu0 %v254, 113
        %v400 = vpop.permute.xlu0 %399
        %401 = vrot.lane.b32.xlu0 %v256, 113
        %v402 = vpop.permute.xlu0 %401
        %vm403 = vcmp.lt.s32.totalorder %v263, 113
        %v404 = vsel %vm403, %v400, %v402
        %v405 = vsel %vm403, %v402, %v400
        %s406 = scalar_lea.vmem [#allocation7], 6
        %v407 = vld [vmem:[%s406] ss:$8 sm:$0x3]
        %v409 = vlaneseq
        %v410 = vshrl.u32 %v409, 7
        %v411 = vsub.s32 0, %v410
        %v412 = vrot.slane %v407, %v411
        %v413 = vlaneseq
        %v414 = vshrl.u32 %v413, 7
        %v415 = vsub.s32 1, %v414
        %v416 = vrot.slane %v407, %v415
        %v419 = vmul.f32 %v404, %v412
        %v420 = vmul.f32 %v405, %v416
        %421 = vst [vmem:[#allocation2 + $0x30] sm:$0xf] %v419
        %422 = vst [vmem:[#allocation2 + $0x38] sm:$0xf] %v420
        %423 = vrot.lane.b32.xlu0 %v254, 112
        %v424 = vpop.permute.xlu0 %423
        %425 = vrot.lane.b32.xlu0 %v256, 112
        %v426 = vpop.permute.xlu0 %425
        %vm427 = vcmp.lt.s32.totalorder %v263, 112
        %v428 = vsel %vm427, %v424, %v426
        %v429 = vsel %vm427, %v426, %v424
        %s430 = scalar_lea.vmem [#allocation7], 7
        %v431 = vld [vmem:[%s430] ss:$8 sm:$0x3]
        %v433 = vlaneseq
        %v434 = vshrl.u32 %v433, 7
        %v435 = vsub.s32 0, %v434
        %v436 = vrot.slane %v431, %v435
        %v437 = vlaneseq
        %v438 = vshrl.u32 %v437, 7
        %v439 = vsub.s32 1, %v438
        %v440 = vrot.slane %v431, %v439
        %v443 = vmul.f32 %v428, %v436
        %v444 = vmul.f32 %v429, %v440
        %v447 = vrot.slane %v443, 4
        %v448 = vrot.slane %v444, 4
        %451 = vst [vmem:[#allocation2 + $0x30] sm:$0xf0] %v447
        %452 = vst [vmem:[#allocation2 + $0x38] sm:$0xf0] %v448
        %453 = vrot.lane.b32.xlu0 %v254, 111
        %v454 = vpop.permute.xlu0 %453
        %455 = vrot.lane.b32.xlu0 %v256, 111
        %v456 = vpop.permute.xlu0 %455
        %vm457 = vcmp.lt.s32.totalorder %v263, 111
        %v458 = vsel %vm457, %v454, %v456
        %v459 = vsel %vm457, %v456, %v454
        %s460 = scalar_lea.vmem [#allocation7], 16
        %v461 = vld [vmem:[%s460] ss:$8 sm:$0x3]
        %v463 = vlaneseq
        %v464 = vshrl.u32 %v463, 7
        %v465 = vsub.s32 0, %v464
        %v466 = vrot.slane %v461, %v465
        %v467 = vlaneseq
        %v468 = vshrl.u32 %v467, 7
        %v469 = vsub.s32 1, %v468
        %v470 = vrot.slane %v461, %v469
        %v473 = vmul.f32 %v458, %v466
        %v474 = vmul.f32 %v459, %v470
        %475 = vst [vmem:[#allocation2 + $0x40] sm:$0xf] %v473
        %476 = vst [vmem:[#allocation2 + $0x48] sm:$0xf] %v474
        %v477 = vld [vmem:[#allocation9] sm:$0xff]
        %v478 = vld [vmem:[#allocation2] sm:$0xff]
        %v479 = vld [vmem:[#allocation2 + $0x8] sm:$0xff]
        %v480 = vld [vmem:[#allocation2 + $0x10] sm:$0xff]
        %v481 = vld [vmem:[#allocation2 + $0x18] sm:$0xff]
        %v482 = vld [vmem:[#allocation2 + $0x20] sm:$0xff]
        %v483 = vld [vmem:[#allocation2 + $0x28] sm:$0xff]
        %v484 = vld [vmem:[#allocation2 + $0x30] sm:$0xff]
        %v485 = vld [vmem:[#allocation2 + $0x38] sm:$0xff]
        %v486 = vld [vmem:[#allocation2 + $0x40] sm:$0xf]
        %v487 = vld [vmem:[#allocation2 + $0x48] sm:$0xf]
        %vm488 = vcmask 293888
        %v490 = vsel %vm488, %v477, 0
        %vm492 = vcmask 1043456
        %v494 = vsel %vm492, %v486, 0
        %v497 = vsel %vm492, %v487, 0
        %499 = vmatprep.subr.mxu0 0.0
        %500 = vmatpush1.msra.mxu0 0.0
        %501 = vmatprep.subr.mxu0 0.0
        %502 = vmatpush1.msra.mxu0 0.0
        %503 = vmatprep.subr.mxu0 0.0
        %504 = vmatpush1.msra.mxu0 0.0
        %505 = vmatprep.subr.mxu0 0.0
        %506 = vmatpush1.msra.mxu0 0.0
        %507 = vmatprep.subr.mxu0 0.0
        %508 = vmatpush1.msra.mxu0 0.0
        %509 = vmatprep.subr.mxu0 0.0
        %510 = vmatpush1.msra.mxu0 0.0
        %511 = vmatprep.subr.mxu0 0.0
        %512 = vmatpush1.msra.mxu0 0.0
        %513 = vmatprep.subr.mxu0 0.0
        %514 = vmatpush1.msra.mxu0 0.0
        %515 = vmatprep.subr.mxu0 0.0
        %516 = vmatpush1.msra.mxu0 0.0
        %517 = vmatprep.subr.mxu0 0.0
        %518 = vmatpush1.msra.mxu0 0.0
        %519 = vmatprep.subr.mxu0 0.0
        %520 = vmatpush1.msra.mxu0 0.0
        %521 = vmatprep.subr.mxu0 %v497
        %522 = vmatpush1.msra.mxu0 %v494
        %523 = vmatprep.subr.mxu0 %v485
        %524 = vmatpush1.msra.mxu0 %v484
        %525 = vmatprep.subr.mxu0 %v483
        %526 = vmatpush1.msra.mxu0 %v482
        %527 = vmatprep.subr.mxu0 %v481
        %528 = vmatpush1.msra.mxu0 %v480
        %529 = vmatprep.subr.mxu0 %v479
        %530 = vmatpush1.msra.mxu0 %v478
        %531 = vmatprep.subr.mxu0 0.0
        %532 = vmatpush2.msra.mxu0 0.0
        %533 = vmatprep.subr.mxu0 0.0
        %534 = vmatpush2.msra.mxu0 0.0
        %535 = vmatprep.subr.mxu0 0.0
        %536 = vmatpush2.msra.mxu0 0.0
        %537 = vmatprep.subr.mxu0 0.0
        %538 = vmatpush2.msra.mxu0 0.0
        %539 = vmatprep.subr.mxu0 0.0
        %540 = vmatpush2.msra.mxu0 0.0
        %541 = vmatprep.subr.mxu0 0.0
        %542 = vmatpush2.msra.mxu0 0.0
        %543 = vmatprep.subr.mxu0 0.0
        %544 = vmatpush2.msra.mxu0 0.0
        %545 = vmatprep.subr.mxu0 0.0
        %546 = vmatpush2.msra.mxu0 0.0
        %547 = vmatprep.subr.mxu0 0.0
        %548 = vmatpush2.msra.mxu0 0.0
        %549 = vmatprep.subr.mxu0 0.0
        %550 = vmatpush2.msra.mxu0 0.0
        %551 = vmatprep.subr.mxu0 0.0
        %552 = vmatpush2.msra.mxu0 0.0
        %553 = vmatprep.subr.mxu0 0.0
        %554 = vmatpush2.msra.mxu0 0.0
        %555 = vmatprep.subr.mxu0 0.0
        %556 = vmatpush2.msra.mxu0 0.0
        %557 = vmatprep.subr.mxu0 0.0
        %558 = vmatpush2.msra.mxu0 0.0
        %559 = vmatprep.subr.mxu0 0.0
        %560 = vmatpush2.msra.mxu0 0.0
        %561 = vmatprep.subr.mxu0 0.0
        %562 = vmatpush2.msra.mxu0 0.0
        %563 = vmatprep.mubr.f32.mxu0 0.0
        %564 = vmatmul.mubr.f32.gmra.mxu0 %v490
        %v565 = vpop.f32.mrf.mxu0
        %v566 = vadd.f32 0.0, %v565
        %v567 = vpop.f32.mrf.mxu0
        %v568 = vadd.f32 0.0, %v567
        %569 = vdwg.mxu0
        %v570 = vadd.f32 %v566, %v568
        %571 = vadd.xlane.f32.xlu0 %v570
        %v572 = vpop.xlane.xlu0 %571
        %v573 = vmul.f32 %v572, 0.00390625
        %v574 = vsub.f32 %v566, %v573
        %v575 = vsub.f32 %v568, %v573
        %v576 = vmul.f32 %v574, %v574
        %v577 = vmul.f32 %v575, %v575
        %v578 = vadd.f32 %v576, %v577
        %579 = vadd.xlane.f32.xlu0 %v578
        %v580 = vpop.xlane.xlu0 %579
        %v581 = vmul.f32 %v580, 0.00390625
        %v582 = vadd.f32 %v581, 1e-05
        %v583 = vrsqrt.pop %v582
        %v584 = vmul.f32 %v574, %v583
        %v585 = vmul.f32 %v575, %v583
        %586 = vrot.lane.b32.xlu0 %v584, 17
        %v587 = vpop.permute.xlu0 %586
        %588 = vrot.lane.b32.xlu0 %v585, 17
        %v589 = vpop.permute.xlu0 %588
        %v590 = vsel %vm264, %v587, %v589
        %v591 = vsel %vm264, %v589, %v587
        %v592 = vld [vmem:[#allocation7] ss:$8 sm:$0x3]
        %v594 = vlaneseq
        %v595 = vshrl.u32 %v594, 7
        %v596 = vsub.s32 0, %v595
        %v597 = vrot.slane %v592, %v596
        %v598 = vlaneseq
        %v599 = vshrl.u32 %v598, 7
        %v600 = vsub.s32 1, %v599
        %v601 = vrot.slane %v592, %v600
        %v604 = vmul.f32 %v591, %v597
        %v605 = vmul.f32 %v590, %v601
        %606 = vst [vmem:[#allocation3] sm:$0xff] %v604
        %607 = vst [vmem:[#allocation3 + $0x8] sm:$0xff] %v605
        %608 = vrot.lane.b32.xlu0 %v584, 16
        %v609 = vpop.permute.xlu0 %608
        %610 = vrot.lane.b32.xlu0 %v585, 16
        %v611 = vpop.permute.xlu0 %610
        %v612 = vsel %vm287, %v609, %v611
        %v613 = vsel %vm287, %v611, %v609
        %v614 = vld [vmem:[%s290] ss:$8 sm:$0x3]
        %v616 = vlaneseq
        %v617 = vshrl.u32 %v616, 7
        %v618 = vsub.s32 0, %v617
        %v619 = vrot.slane %v614, %v618
        %v620 = vlaneseq
        %v621 = vshrl.u32 %v620, 7
        %v622 = vsub.s32 1, %v621
        %v623 = vrot.slane %v614, %v622
        %v626 = vmul.f32 %v613, %v619
        %v627 = vmul.f32 %v612, %v623
        %628 = vst [vmem:[#allocation3 + $0x10] sm:$0xff] %v626
        %629 = vst [vmem:[#allocation3 + $0x18] sm:$0xff] %v627
        %630 = vrot.lane.b32.xlu0 %v584, 15
        %v631 = vpop.permute.xlu0 %630
        %632 = vrot.lane.b32.xlu0 %v585, 15
        %v633 = vpop.permute.xlu0 %632
        %v634 = vsel %vm317, %v631, %v633
        %v635 = vsel %vm317, %v633, %v631
        %v636 = vld [vmem:[%s320] ss:$8 sm:$0x3]
        %v638 = vlaneseq
        %v639 = vshrl.u32 %v638, 7
        %v640 = vsub.s32 0, %v639
        %v641 = vrot.slane %v636, %v640
        %v642 = vlaneseq
        %v643 = vshrl.u32 %v642, 7
        %v644 = vsub.s32 1, %v643
        %v645 = vrot.slane %v636, %v644
        %v648 = vmul.f32 %v635, %v641
        %v649 = vmul.f32 %v634, %v645
        %650 = vst [vmem:[#allocation3 + $0x20] sm:$0xff] %v648
        %651 = vst [vmem:[#allocation3 + $0x28] sm:$0xff] %v649
        %652 = vrot.lane.b32.xlu0 %v584, 1
        %v653 = vpop.permute.xlu0 %652
        %654 = vrot.lane.b32.xlu0 %v585, 1
        %v655 = vpop.permute.xlu0 %654
        %v656 = vsel %vm341, %v653, %v655
        %v657 = vsel %vm341, %v655, %v653
        %v658 = vld [vmem:[%s344] ss:$8 sm:$0x3]
        %v660 = vlaneseq
        %v661 = vshrl.u32 %v660, 7
        %v662 = vsub.s32 0, %v661
        %v663 = vrot.slane %v658, %v662
        %v664 = vlaneseq
        %v665 = vshrl.u32 %v664, 7
        %v666 = vsub.s32 1, %v665
        %v667 = vrot.slane %v658, %v666
        %v670 = vmul.f32 %v657, %v663
        %v671 = vmul.f32 %v656, %v667
        %672 = vst [vmem:[#allocation3 + $0x30] sm:$0xff] %v670
        %673 = vst [vmem:[#allocation3 + $0x38] sm:$0xff] %v671
        %674 = vst [vmem:[#allocation3 + $0x40] sm:$0xff] %v584
        %675 = vst [vmem:[#allocation3 + $0x48] sm:$0xff] %v585
        %676 = vrot.lane.b32.xlu0 %v584, 127
        %v677 = vpop.permute.xlu0 %676
        %678 = vrot.lane.b32.xlu0 %v585, 127
        %v679 = vpop.permute.xlu0 %678
        %v680 = vsel %vm373, %v677, %v679
        %v681 = vsel %vm373, %v679, %v677
        %v682 = vld [vmem:[%s376] ss:$8 sm:$0x3]
        %v684 = vlaneseq
        %v685 = vshrl.u32 %v684, 7
        %v686 = vsub.s32 0, %v685
        %v687 = vrot.slane %v682, %v686
        %v688 = vlaneseq
        %v689 = vshrl.u32 %v688, 7
        %v690 = vsub.s32 1, %v689
        %v691 = vrot.slane %v682, %v690
        %v694 = vmul.f32 %v680, %v687
        %v695 = vmul.f32 %v681, %v691
        %696 = vst [vmem:[#allocation3 + $0x50] sm:$0xff] %v694
        %697 = vst [vmem:[#allocation3 + $0x58] sm:$0xff] %v695
        %698 = vrot.lane.b32.xlu0 %v584, 113
        %v699 = vpop.permute.xlu0 %698
        %700 = vrot.lane.b32.xlu0 %v585, 113
        %v701 = vpop.permute.xlu0 %700
        %v702 = vsel %vm403, %v699, %v701
        %v703 = vsel %vm403, %v701, %v699
        %v704 = vld [vmem:[%s406] ss:$8 sm:$0x3]
        %v706 = vlaneseq
        %v707 = vshrl.u32 %v706, 7
        %v708 = vsub.s32 0, %v707
        %v709 = vrot.slane %v704, %v708
        %v710 = vlaneseq
        %v711 = vshrl.u32 %v710, 7
        %v712 = vsub.s32 1, %v711
        %v713 = vrot.slane %v704, %v712
        %v716 = vmul.f32 %v702, %v709
        %v717 = vmul.f32 %v703, %v713
        %718 = vst [vmem:[#allocation3 + $0x60] sm:$0xff] %v716
        %719 = vst [vmem:[#allocation3 + $0x68] sm:$0xff] %v717
        %720 = vrot.lane.b32.xlu0 %v584, 112
        %v721 = vpop.permute.xlu0 %720
        %722 = vrot.lane.b32.xlu0 %v585, 112
        %v723 = vpop.permute.xlu0 %722
        %v724 = vsel %vm427, %v721, %v723
        %v725 = vsel %vm427, %v723, %v721
        %v726 = vld [vmem:[%s430] ss:$8 sm:$0x3]
        %v728 = vlaneseq
        %v729 = vshrl.u32 %v728, 7
        %v730 = vsub.s32 0, %v729
        %v731 = vrot.slane %v726, %v730
        %v732 = vlaneseq
        %v733 = vshrl.u32 %v732, 7
        %v734 = vsub.s32 1, %v733
        %v735 = vrot.slane %v726, %v734
        %v738 = vmul.f32 %v724, %v731
        %v739 = vmul.f32 %v725, %v735
        %740 = vst [vmem:[#allocation3 + $0x70] sm:$0xff] %v738
        %741 = vst [vmem:[#allocation3 + $0x78] sm:$0xff] %v739
        %742 = vrot.lane.b32.xlu0 %v584, 111
        %v743 = vpop.permute.xlu0 %742
        %744 = vrot.lane.b32.xlu0 %v585, 111
        %v745 = vpop.permute.xlu0 %744
        %v746 = vsel %vm457, %v743, %v745
        %v747 = vsel %vm457, %v745, %v743
        %v748 = vld [vmem:[%s460] ss:$8 sm:$0x3]
        %v750 = vlaneseq
        %v751 = vshrl.u32 %v750, 7
        %v752 = vsub.s32 0, %v751
        %v753 = vrot.slane %v748, %v752
        %v754 = vlaneseq
        %v755 = vshrl.u32 %v754, 7
        %v756 = vsub.s32 1, %v755
        %v757 = vrot.slane %v748, %v756
        %v760 = vmul.f32 %v746, %v753
        %v761 = vmul.f32 %v747, %v757
        %762 = vst [vmem:[#allocation3 + $0x80] sm:$0xff] %v760
        %763 = vst [vmem:[#allocation3 + $0x88] sm:$0xff] %v761
        %v764 = vld [vmem:[#allocation10] sm:$0xff]
        %v765 = vld [vmem:[#allocation3] sm:$0xff]
        %v766 = vld [vmem:[#allocation3 + $0x8] sm:$0xff]
        %v767 = vld [vmem:[#allocation3 + $0x10] sm:$0xff]
        %v768 = vld [vmem:[#allocation3 + $0x18] sm:$0xff]
        %v769 = vld [vmem:[#allocation3 + $0x20] sm:$0xff]
        %v770 = vld [vmem:[#allocation3 + $0x28] sm:$0xff]
        %v771 = vld [vmem:[#allocation3 + $0x30] sm:$0xff]
        %v772 = vld [vmem:[#allocation3 + $0x38] sm:$0xff]
        %v773 = vld [vmem:[#allocation3 + $0x40] sm:$0xff]
        %v774 = vld [vmem:[#allocation3 + $0x48] sm:$0xff]
        %v775 = vld [vmem:[#allocation3 + $0x50] sm:$0xff]
        %v776 = vld [vmem:[#allocation3 + $0x58] sm:$0xff]
        %v777 = vld [vmem:[#allocation3 + $0x60] sm:$0xff]
        %v778 = vld [vmem:[#allocation3 + $0x68] sm:$0xff]
        %v779 = vld [vmem:[#allocation3 + $0x70] sm:$0xff]
        %v780 = vld [vmem:[#allocation3 + $0x78] sm:$0xff]
        %v781 = vld [vmem:[#allocation3 + $0x80] sm:$0xff]
        %v782 = vld [vmem:[#allocation3 + $0x88] sm:$0xff]
        %vm783 = vcmask 588800
        %v785 = vsel %vm783, %v764, 0
        %787 = vmatprep.subr.mxu0 0.0
        %788 = vmatpush1.msra.mxu0 0.0
        %789 = vmatprep.subr.mxu0 0.0
        %790 = vmatpush1.msra.mxu0 0.0
        %791 = vmatprep.subr.mxu0 0.0
        %792 = vmatpush1.msra.mxu0 0.0
        %793 = vmatprep.subr.mxu0 0.0
        %794 = vmatpush1.msra.mxu0 0.0
        %795 = vmatprep.subr.mxu0 0.0
        %796 = vmatpush1.msra.mxu0 0.0
        %797 = vmatprep.subr.mxu0 0.0
        %798 = vmatpush1.msra.mxu0 0.0
        %799 = vmatprep.subr.mxu0 0.0
        %800 = vmatpush1.msra.mxu0 0.0
        %801 = vmatprep.subr.mxu0 %v782
        %802 = vmatpush1.msra.mxu0 %v781
        %803 = vmatprep.subr.mxu0 %v780
        %804 = vmatpush1.msra.mxu0 %v779
        %805 = vmatprep.subr.mxu0 %v778
        %806 = vmatpush1.msra.mxu0 %v777
        %807 = vmatprep.subr.mxu0 %v776
        %808 = vmatpush1.msra.mxu0 %v775
        %809 = vmatprep.subr.mxu0 %v774
        %810 = vmatpush1.msra.mxu0 %v773
        %811 = vmatprep.subr.mxu0 %v772
        %812 = vmatpush1.msra.mxu0 %v771
        %813 = vmatprep.subr.mxu0 %v770
        %814 = vmatpush1.msra.mxu0 %v769
        %815 = vmatprep.subr.mxu0 %v768
        %816 = vmatpush1.msra.mxu0 %v767
        %817 = vmatprep.subr.mxu0 %v766
        %818 = vmatpush1.msra.mxu0 %v765
        %819 = vmatprep.subr.mxu0 0.0
        %820 = vmatpush2.msra.mxu0 0.0
        %821 = vmatprep.subr.mxu0 0.0
        %822 = vmatpush2.msra.mxu0 0.0
        %823 = vmatprep.subr.mxu0 0.0
        %824 = vmatpush2.msra.mxu0 0.0
        %825 = vmatprep.subr.mxu0 0.0
        %826 = vmatpush2.msra.mxu0 0.0
        %827 = vmatprep.subr.mxu0 0.0
        %828 = vmatpush2.msra.mxu0 0.0
        %829 = vmatprep.subr.mxu0 0.0
        %830 = vmatpush2.msra.mxu0 0.0
        %831 = vmatprep.subr.mxu0 0.0
        %832 = vmatpush2.msra.mxu0 0.0
        %833 = vmatprep.subr.mxu0 0.0
        %834 = vmatpush2.msra.mxu0 0.0
        %835 = vmatprep.subr.mxu0 0.0
        %836 = vmatpush2.msra.mxu0 0.0
        %837 = vmatprep.subr.mxu0 0.0
        %838 = vmatpush2.msra.mxu0 0.0
        %839 = vmatprep.subr.mxu0 0.0
        %840 = vmatpush2.msra.mxu0 0.0
        %841 = vmatprep.subr.mxu0 0.0
        %842 = vmatpush2.msra.mxu0 0.0
        %843 = vmatprep.subr.mxu0 0.0
        %844 = vmatpush2.msra.mxu0 0.0
        %845 = vmatprep.subr.mxu0 0.0
        %846 = vmatpush2.msra.mxu0 0.0
        %847 = vmatprep.subr.mxu0 0.0
        %848 = vmatpush2.msra.mxu0 0.0
        %849 = vmatprep.subr.mxu0 0.0
        %850 = vmatpush2.msra.mxu0 0.0
        %851 = vmatprep.mubr.f32.mxu0 0.0
        %852 = vmatmul.mubr.f32.gmra.mxu0 %v785
        %v853 = vpop.f32.mrf.mxu0
        %v854 = vadd.f32 0.0, %v853
        %v855 = vpop.f32.mrf.mxu0
        %v856 = vadd.f32 0.0, %v855
        %857 = vdwg.mxu0
        %v858 = vadd.f32 %v854, %v856
        %859 = vadd.xlane.f32.xlu0 %v858
        %v860 = vpop.xlane.xlu0 %859
        %v861 = vmul.f32 %v860, 0.00390625
        %v862 = vsub.f32 %v854, %v861
        %v863 = vsub.f32 %v856, %v861
        %v864 = vmul.f32 %v862, %v862
        %v865 = vmul.f32 %v863, %v863
        %v866 = vadd.f32 %v864, %v865
        %867 = vadd.xlane.f32.xlu0 %v866
        %v868 = vpop.xlane.xlu0 %867
        %v869 = vmul.f32 %v868, 0.00390625
        %v870 = vadd.f32 %v869, 1e-05
        %v871 = vrsqrt.pop %v870
        %v872 = vmul.f32 %v862, %v871
        %v873 = vmul.f32 %v863, %v871
        %874 = vst [vmem:[%s253] sm:$0xff] %v872
        %875 = vst [vmem:[%s253 + $0x8] sm:$0xff] %v873
        %s876 = sand.u32 %s120, 1
        %s877 = scalar_lea.sflag [#allocation6], %s876
        %s878 = sand.u32 %s120, 1
        %s879 = smul.addr %s878, 16
        %s880 = scalar_lea.vmem [#allocation12], %s879
        // Predicated region
        $region53: #{tpu_custom_call.1} parent=35 // pred_check
          %p881 = pneg %p130
        $region54: #{tpu_custom_call.1} parent=35 // pred_check_branch
          %883 = sbr.rel (%p881) target = $region56
        $region55: #{tpu_custom_call.1} parent=35 // pred_region
          %s885 = ssub.s32 256, 256
          %886 = vsyncadd %s877, %s885
          %s887 = smul.addr %s23, 2
          %s888 = smul.addr %s887, 128
          %s889 = scalar_lea.hbm %s4, %s888
          %s891 = sshll.u32 %s880, 4
          %s892 = int_to_ptr.vmem [resolvable:$true] %s891
          %894 = dma.vmem_to_hbm [thread:$0]  %s892, 256, %s889, %s877
        $region56: #{tpu_custom_call.1} parent=35 // pred_fallthru
          _
      $region36: #{tpu_custom_call.1} parent=5 // pred_fallthru
        _
      %p895 = scmp.le.s32.totalorder 2, %s18
      // Predicated region
      $region57: #{tpu_custom_call.1} parent=5 // pred_check
        %p896 = pneg %p895
      $region58: #{tpu_custom_call.1} parent=5 // pred_check_branch
        %898 = sbr.rel (%p896) target = $region60
      $region59: #{tpu_custom_call.1} parent=5 // pred_region
        %s899 = ssub.s32 %s18, 2
        // Predicated region
        $region61: #{tpu_custom_call.1} parent=59 // pred_check
          %p900 = pneg %p136
        $region62: #{tpu_custom_call.1} parent=59 // pred_check_branch
          %902 = sbr.rel (%p900) target = $region64
        $region63: #{tpu_custom_call.1} parent=59 // pred_region
          %s903 = sand.u32 %s121, 1
          %s904 = scalar_lea.sflag [#allocation6], %s903
          %s905 = sand.u32 %s121, 1
          %s906 = smul.addr %s905, 16
          %s907 = scalar_lea.vmem [#allocation12], %s906
          %908 = dma.done %s904, 256
        $region64: #{tpu_custom_call.1} parent=59 // pred_fallthru
          _
      $region60: #{tpu_custom_call.1} parent=5 // pred_fallthru
        _
    $region6: #{tpu_custom_call.1} parent=1 // loop_footer
      %s22 = sadd.s32 1, %s18
    $region7: #{tpu_custom_call.1} parent=1 // loop_footer_branch
      %17 = sbr.rel target = $region3
    $region8: #{tpu_custom_call.1} parent=1 // loop_exit
      _
    %909 = vsyncpa [#allocation5], 1
    %s910 = scalar_lea.sflag [#allocation5], 1
    %911 = vsyncpa %s910, 1
    %912 = vsyncpa [#allocation8], 1
    %913 = vsyncpa [#allocation11], 1
    %914 = vsyncpa [#allocation6], 1
    %s915 = scalar_lea.sflag [#allocation6], 1
    %916 = vsyncpa %s915, 1

</llo_original>
